<compile_context>
chip_gen: v5e
topology: v5e:2x2
jax: 0.10.0
libtpu: 0.0.40
codegen_flags: <defaults>
</compile_context>

<pallas_src>
import functools

import jax
import jax.numpy as jnp
from jax import lax
from jax.experimental import pallas as pl
from jax.experimental.pallas import tpu as pltpu


def _select_loss_kernel(predict_ref, label_ref, select_ref,
                        ce_out_ref, sel_out_ref, ce_acc, sel_acc,
                        *, n, tile_n, num_tiles, has_ghost, mask_rows):
    s = pl.program_id(0)                       # parallel slice (megacore)
    t = pl.program_id(1)                       # row-tile within slice
    tiles_per_slice = pl.num_programs(1)
    tile_idx = s * tiles_per_slice + t

    # Init this slice's accumulators at its first row-tile.
    @pl.when(t == 0)
    def _init():
        ce_acc[...] = jnp.zeros_like(ce_acc)
        sel_acc[...] = jnp.zeros_like(sel_acc)

    def _accumulate():
        logits = predict_ref[...].astype(jnp.float32)        # (tile_n, C)
        labels = label_ref[...]                               # (tile_n, 1) i32

        # Per-row cross entropy: logsumexp(logits) - logits[label].
        row_max = jnp.max(logits, axis=-1, keepdims=True)
        sumexp = jnp.sum(jnp.exp(logits - row_max), axis=-1, keepdims=True)
        lse = jnp.log(sumexp) + row_max
        class_ids = lax.broadcasted_iota(jnp.int32, logits.shape, 1)
        tgt = jnp.sum(jnp.where(class_ids == labels, logits, 0.0),
                      axis=-1, keepdims=True)
        ce = lse - tgt                                         # (tile_n, 1)

        if mask_rows:
            # Only the last real tile is partial; garbage rows cannot
            # contaminate valid rows (all ops are per-row), so masking the
            # per-row ce column is sufficient.
            row_ids = tile_idx * tile_n + lax.broadcasted_iota(
                jnp.int32, (tile_n, 1), 0)
            ce = jnp.where(row_ids < n, ce, 0.0)

        # Pure VPU vreg adds into resident accumulators: no per-step
        # cross-lane/cross-sublane reduce, no scalar broadcast round-trip.
        ce_acc[...] += ce
        sel_acc[...] += select_ref[0]          # lane-dense, zero-padded

    if has_ghost:
        # Odd tile count split across 2 slices: the clamped ghost tile's
        # contribution is skipped (its DMA re-reads a valid tile, unused).
        pl.when(tile_idx < num_tiles)(_accumulate)
    else:
        _accumulate()

    # One cross-lane/cross-sublane reduce per slice, at its last tile.
    @pl.when(t == tiles_per_slice - 1)
    def _finalize():
        ce_out_ref[...] = jnp.zeros_like(ce_out_ref) + jnp.sum(ce_acc[...])
        sel_out_ref[...] = jnp.zeros_like(sel_out_ref) + jnp.sum(sel_acc[...])


def select_loss_pallas(predict, select, label, *, cov=0.8, lamda=0.1,
                       vmem_budget_bytes=12 * 1024 * 1024):
    """predict: (N, C) float logits; select: (N,) or (N, 1); label: (N,) int."""
    n, c = predict.shape
    itemsize = jnp.dtype(predict.dtype).itemsize

    # True per-row VMEM cost of one grid step: double-buffered inputs plus
    # resident scratch.  The (tile_n, 1) label block and the ce column
    # accumulator are lane padded to 128 lanes in VMEM -> 512 B/row each.
    per_row = (2 * c * itemsize      # predict block, x2 buffers
               + 2 * 512             # label block (lane padded), x2 buffers
               + 2 * 4               # lane-dense select block, x2 buffers
               + 512                 # ce column accumulator (scratch)
               + 4)                  # select accumulator (scratch)

    budget_rows = max(128, (vmem_budget_bytes // per_row) // 128 * 128)

    if n <= budget_rows:
        tile_n = n                   # single block; full-extent dims are legal
        num_tiles = 1
    else:
        tile_n = budget_rows         # multiple of 128
        num_tiles = pl.cdiv(n, tile_n)

    num_slices = 2 if num_tiles >= 2 else 1          # v7x 2-TC split
    tiles_per_slice = pl.cdiv(num_tiles, num_slices)
    num_tiles_p = num_slices * tiles_per_slice       # includes ghost tiles
    has_ghost = num_tiles_p > num_tiles
    mask_rows = (num_tiles * tile_n) > n             # last real tile partial

    # Lane-dense, zero-padded select: (num_tiles_p, sel_rows, 128).
    sel_rows = pl.cdiv(tile_n, 128)
    cap = num_tiles_p * sel_rows * 128
    sel_flat = select.reshape(-1).astype(jnp.float32)
    sel3d = jnp.pad(sel_flat, (0, cap - n)).reshape(num_tiles_p, sel_rows, 128)

    label2d = label.reshape(n, 1).astype(jnp.int32)

    last_real = num_tiles - 1
    T = tiles_per_slice

    def row_block_map(s, t):
        # Clamp ghost tiles (odd tile count, 2-way split) onto a real tile.
        return (jnp.minimum(s * T + t, last_real), 0)

    def sel_map(s, t):
        return (s * T + t, 0, 0)

    out_map = lambda s, t: (s, 0)

    kernel = functools.partial(_select_loss_kernel, n=n, tile_n=tile_n,
                               num_tiles=num_tiles, has_ghost=has_ghost,
                               mask_rows=mask_rows)
    out_rows = num_slices * 8

    # Explicit VMEM limit: >= default on v6e/v7x, raises v5e's 16 MiB default.
    est_vmem = (2 * tile_n * c * itemsize + 2 * tile_n * 512
                + 3 * sel_rows * 128 * 4 + tile_n * 512
                + 4 * out_rows * 128 * 4)
    vmem_limit = int(min(100 * 2**20, max(32 * 2**20, est_vmem + (4 << 20))))

    cost = pl.CostEstimate(
        flops=7 * n * c,
        transcendentals=n * c + 2 * n,
        bytes_accessed=n * c * itemsize + n * 4 + cap * 4
        + 2 * out_rows * 128 * 4)

    ce_part, sel_part = pl.pallas_call(
        kernel,
        out_shape=(jax.ShapeDtypeStruct((out_rows, 128), jnp.float32),
                   jax.ShapeDtypeStruct((out_rows, 128), jnp.float32)),
        grid_spec=pltpu.PrefetchScalarGridSpec(
            num_scalar_prefetch=0,
            grid=(num_slices, tiles_per_slice),
            in_specs=[
                pl.BlockSpec((tile_n, c), row_block_map),
                pl.BlockSpec((tile_n, 1), row_block_map),
                pl.BlockSpec((1, sel_rows, 128), sel_map),
            ],
            out_specs=[
                pl.BlockSpec((8, 128), out_map),
                pl.BlockSpec((8, 128), out_map),
            ],
            scratch_shapes=[
                pltpu.VMEM((tile_n, 1), jnp.float32),     # ce column accumulator
                pltpu.VMEM((sel_rows, 128), jnp.float32),  # select accumulator
            ]),
        compiler_params=pltpu.CompilerParams(
            dimension_semantics=("parallel", "arbitrary"),
            vmem_limit_bytes=vmem_limit),
        cost_estimate=cost,
    )(predict, label2d, sel3d)

    # Tiny scalar epilogue (per-slice partial sums -> loss) in plain JAX.
    sum_ce = ce_part[::8, 0].sum()
    sum_sel = sel_part[::8, 0].sum()
    mean_ce = sum_ce / n
    em_cov = sum_sel / n
    em_risk = mean_ce * em_cov
    penalty = jnp.maximum(jnp.float32(0.0), jnp.float32(cov) - em_cov) ** 2
    return em_risk + jnp.float32(lamda) * penalty


def _select_loss_ref(predict, select, label, *, cov=0.8, lamda=0.1):
    # Pure-JAX reference mirroring the PyTorch module.
    logp = jax.nn.log_softmax(predict.astype(jnp.float32), axis=-1)
    ce = -jnp.take_along_axis(logp, label[:, None], axis=-1)[:, 0]
    mean_ce = ce.mean()
    sel = select.reshape(-1).astype(jnp.float32)
    em_cov = sel.mean()
    em_risk = (mean_ce * sel).mean()
    penalty = jnp.maximum(0.0, cov - em_cov) ** 2
    return em_risk + lamda * penalty


if __name__ == "__main__":
    # Case 1: small shapes (single full-block tile, tile_n == N exactly).
    k1, k2, k3 = jax.random.split(jax.random.PRNGKey(0), 3)
    N, C = 16, 10
    predict = jax.random.normal(k1, (N, C), dtype=jnp.float32)
    select = jax.nn.sigmoid(jax.random.normal(k2, (N, 1), dtype=jnp.float32))
    label = jax.random.randint(k3, (N,), 0, C, dtype=jnp.int32)

    loss = jax.block_until_ready(
        select_loss_pallas(predict, select, label, cov=0.8, lamda=0.1))
    ref = _select_loss_ref(predict, select, label, cov=0.8, lamda=0.1)
    assert jnp.allclose(loss, ref, atol=1e-5, rtol=1e-5), (loss, ref)

    # Case 2: force multi-tile + 2-way split with an odd tile count (ghost
    # tile exercised) and a masked partial last tile.
    k4, k5, k6 = jax.random.split(jax.random.PRNGKey(1), 3)
    N2, C2 = 2000, 32
    predict2 = jax.random.normal(k4, (N2, C2), dtype=jnp.float32)
    select2 = jax.nn.sigmoid(jax.random.normal(k5, (N2,), dtype=jnp.float32))
    label2 = jax.random.randint(k6, (N2,), 0, C2, dtype=jnp.int32)

    loss2 = jax.block_until_ready(
        select_loss_pallas(predict2, select2, label2, cov=0.8, lamda=0.1,
                           vmem_budget_bytes=1536 * 1024))
    ref2 = _select_loss_ref(predict2, select2, label2, cov=0.8, lamda=0.1)
    assert jnp.allclose(loss2, ref2, atol=1e-5, rtol=1e-4), (loss2, ref2)

    print("KERNEL_OK")
</pallas_src>

<mosaic_0001>
module attributes {stable_mosaic.version = 11 : i64} {
  func.func @_select_loss_kernel(%arg0: i32, %arg1: i32, %arg2: memref<16x10xf32, #tpu.memory_space<vmem>>, %arg3: memref<16x1xi32, #tpu.memory_space<vmem>>, %arg4: memref<1x1x128xf32, #tpu.memory_space<vmem>>, %arg5: memref<8x128xf32, #tpu.memory_space<vmem>>, %arg6: memref<8x128xf32, #tpu.memory_space<vmem>>, %arg7: memref<16x1xf32, #tpu.memory_space<vmem>>, %arg8: memref<1x128xf32, #tpu.memory_space<vmem>>) attributes {dimension_semantics = [#tpu.dimension_semantics<parallel>, #tpu.dimension_semantics<arbitrary>], iteration_bounds = array<i64: 1, 1>, scalar_prefetch = 0 : i64, scratch_operands = 2 : i64, tpu.core_type = #tpu.core_type<tc>, window_params = [{transform_indices = @transform_0, window_bounds = array<i64: 16, 10>}, {transform_indices = @transform_1, window_bounds = array<i64: 16, 1>}, {transform_indices = @transform_2, window_bounds = array<i64: 1, 1, 128>}, {transform_indices = @transform_3, window_bounds = array<i64: 8, 128>}, {transform_indices = @transform_4, window_bounds = array<i64: 8, 128>}]} {
    %c0_i32 = arith.constant 0 : i32
    %0 = arith.cmpi eq, %arg1, %c0_i32 : i32
    %1 = arith.extui %0 : i1 to i32
    %c0_i32_0 = arith.constant 0 : i32
    %2 = arith.cmpi ne, %1, %c0_i32_0 : i32
    scf.if %2 {
      %cst_20 = arith.constant 0.000000e+00 : f32
      %33 = vector.broadcast %cst_20 : f32 to vector<16x1xf32>
      %c0_21 = arith.constant 0 : index
      %c0_22 = arith.constant 0 : index
      %34 = vector.load %arg7[%c0_21, %c0_22] : memref<16x1xf32, #tpu.memory_space<vmem>>, vector<16x1xf32>
      tpu.vector_store %arg7[%c0_21, %c0_22], %33 {strides = array<i32>} : memref<16x1xf32, #tpu.memory_space<vmem>>, vector<16x1xf32>,
      %cst_23 = arith.constant 0.000000e+00 : f32
      %35 = vector.broadcast %cst_23 : f32 to vector<1x128xf32>
      %c0_24 = arith.constant 0 : index
      %c0_25 = arith.constant 0 : index
      %36 = vector.load %arg8[%c0_24, %c0_25] : memref<1x128xf32, #tpu.memory_space<vmem>>, vector<1x128xf32>
      tpu.vector_store %arg8[%c0_24, %c0_25], %35 {strides = array<i32>} : memref<1x128xf32, #tpu.memory_space<vmem>>, vector<1x128xf32>,
    } else {
    }
    %c0 = arith.constant 0 : index
    %c0_1 = arith.constant 0 : index
    %3 = vector.load %arg2[%c0, %c0_1] : memref<16x10xf32, #tpu.memory_space<vmem>>, vector<16x10xf32>
    %c0_2 = arith.constant 0 : index
    %c0_3 = arith.constant 0 : index
    %4 = vector.load %arg3[%c0_2, %c0_3] : memref<16x1xi32, #tpu.memory_space<vmem>>, vector<16x1xi32>
    %cst = arith.constant dense<0xFF800000> : vector<16xf32>
    %5 = vector.multi_reduction <maximumf>, %3, %cst [1] : vector<16x10xf32> to vector<16xf32>
    %6 = vector.shape_cast %5 : vector<16xf32> to vector<16x1xf32>
    %7 = vector.broadcast %6 : vector<16x1xf32> to vector<16x10xf32>
    %8 = arith.subf %3, %7 : vector<16x10xf32>
    %9 = math.exp %8 : vector<16x10xf32>
    %cst_4 = arith.constant dense<0.000000e+00> : vector<16xf32>
    %10 = vector.multi_reduction <add>, %9, %cst_4 [1] : vector<16x10xf32> to vector<16xf32>
    %11 = vector.shape_cast %10 : vector<16xf32> to vector<16x1xf32>
    %12 = math.log %11 : vector<16x1xf32>
    %13 = arith.addf %12, %6 : vector<16x1xf32>
    %14 = tpu.iota {dimensions = array<i32: 1>} : vector<16x10xi32>
    %15 = vector.broadcast %4 : vector<16x1xi32> to vector<16x10xi32>
    %16 = arith.cmpi eq, %14, %15 : vector<16x10xi32>
    %cst_5 = arith.constant 0.000000e+00 : f32
    %17 = vector.broadcast %cst_5 : f32 to vector<16x10xf32>
    %18 = arith.select %16, %3, %17 : vector<16x10xi1>, vector<16x10xf32>
    %cst_6 = arith.constant dense<0.000000e+00> : vector<16xf32>
    %19 = vector.multi_reduction <add>, %18, %cst_6 [1] : vector<16x10xf32> to vector<16xf32>
    %20 = vector.shape_cast %19 : vector<16xf32> to vector<16x1xf32>
    %21 = arith.subf %13, %20 : vector<16x1xf32>
    %c0_7 = arith.constant 0 : index
    %c0_8 = arith.constant 0 : index
    %22 = vector.load %arg7[%c0_7, %c0_8] : memref<16x1xf32, #tpu.memory_space<vmem>>, vector<16x1xf32>
    %23 = arith.addf %22, %21 : vector<16x1xf32>
    %c0_9 = arith.constant 0 : index
    %c0_10 = arith.constant 0 : index
    %24 = vector.load %arg7[%c0_9, %c0_10] : memref<16x1xf32, #tpu.memory_space<vmem>>, vector<16x1xf32>
    tpu.vector_store %arg7[%c0_9, %c0_10], %23 {strides = array<i32>} : memref<16x1xf32, #tpu.memory_space<vmem>>, vector<16x1xf32>,
    %c0_11 = arith.constant 0 : index
    %c0_12 = arith.constant 0 : index
    %25 = vector.load %arg8[%c0_11, %c0_12] : memref<1x128xf32, #tpu.memory_space<vmem>>, vector<1x128xf32>
    %c0_13 = arith.constant 0 : index
    %c0_14 = arith.constant 0 : index
    %c0_15 = arith.constant 0 : index
    %26 = vector.load %arg4[%c0_13, %c0_14, %c0_15] : memref<1x1x128xf32, #tpu.memory_space<vmem>>, vector<1x1x128xf32>
    %27 = vector.shape_cast %26 : vector<1x1x128xf32> to vector<1x128xf32>
    %28 = arith.addf %25, %27 : vector<1x128xf32>
    %c0_16 = arith.constant 0 : index
    %c0_17 = arith.constant 0 : index
    %29 = vector.load %arg8[%c0_16, %c0_17] : memref<1x128xf32, #tpu.memory_space<vmem>>, vector<1x128xf32>
    tpu.vector_store %arg8[%c0_16, %c0_17], %28 {strides = array<i32>} : memref<1x128xf32, #tpu.memory_space<vmem>>, vector<1x128xf32>,
    %c0_i32_18 = arith.constant 0 : i32
    %30 = arith.cmpi eq, %arg1, %c0_i32_18 : i32
    %31 = arith.extui %30 : i1 to i32
    %c0_i32_19 = arith.constant 0 : i32
    %32 = arith.cmpi ne, %31, %c0_i32_19 : i32
    scf.if %32 {
      %cst_20 = arith.constant 0.000000e+00 : f32
      %33 = vector.broadcast %cst_20 : f32 to vector<8x128xf32>
      %c0_21 = arith.constant 0 : index
      %c0_22 = arith.constant 0 : index
      %34 = vector.load %arg7[%c0_21, %c0_22] : memref<16x1xf32, #tpu.memory_space<vmem>>, vector<16x1xf32>
      %35 = vector.shape_cast %34 : vector<16x1xf32> to vector<1x16x1xf32>
      %cst_23 = arith.constant dense<0.000000e+00> : vector<1xf32>
      %36 = vector.multi_reduction <add>, %35, %cst_23 [1, 2] : vector<1x16x1xf32> to vector<1xf32>
      %37 = vector.shape_cast %36 : vector<1xf32> to vector<1x1x1xf32>
      %38 = vector.extract %37[0, 0, 0] : f32 from vector<1x1x1xf32>
      %39 = vector.broadcast %38 : f32 to vector<8x128xf32>
      %40 = arith.addf %33, %39 : vector<8x128xf32>
      %c0_24 = arith.constant 0 : index
      %c0_25 = arith.constant 0 : index
      %41 = vector.load %arg5[%c0_24, %c0_25] : memref<8x128xf32, #tpu.memory_space<vmem>>, vector<8x128xf32>
      tpu.vector_store %arg5[%c0_24, %c0_25], %40 {strides = array<i32>} : memref<8x128xf32, #tpu.memory_space<vmem>>, vector<8x128xf32>,
      %cst_26 = arith.constant 0.000000e+00 : f32
      %42 = vector.broadcast %cst_26 : f32 to vector<8x128xf32>
      %c0_27 = arith.constant 0 : index
      %c0_28 = arith.constant 0 : index
      %43 = vector.load %arg8[%c0_27, %c0_28] : memref<1x128xf32, #tpu.memory_space<vmem>>, vector<1x128xf32>
      %44 = vector.shape_cast %43 : vector<1x128xf32> to vector<1x1x128xf32>
      %cst_29 = arith.constant dense<0.000000e+00> : vector<1xf32>
      %45 = vector.multi_reduction <add>, %44, %cst_29 [1, 2] : vector<1x1x128xf32> to vector<1xf32>
      %46 = vector.shape_cast %45 : vector<1xf32> to vector<1x1x1xf32>
      %47 = vector.extract %46[0, 0, 0] : f32 from vector<1x1x1xf32>
      %48 = vector.broadcast %47 : f32 to vector<8x128xf32>
      %49 = arith.addf %42, %48 : vector<8x128xf32>
      %c0_30 = arith.constant 0 : index
      %c0_31 = arith.constant 0 : index
      %50 = vector.load %arg6[%c0_30, %c0_31] : memref<8x128xf32, #tpu.memory_space<vmem>>, vector<8x128xf32>
      tpu.vector_store %arg6[%c0_30, %c0_31], %49 {strides = array<i32>} : memref<8x128xf32, #tpu.memory_space<vmem>>, vector<8x128xf32>,
    } else {
    }
    return
  }
  func.func @transform_0(%arg0: i32, %arg1: i32) -> (i32, i32) {
    %c1_i32 = arith.constant 1 : i32
    %0 = arith.muli %arg0, %c1_i32 : i32
    %1 = arith.addi %0, %arg1 : i32
    %c0_i32 = arith.constant 0 : i32
    %2 = arith.minsi %1, %c0_i32 : i32
    %c0_i32_0 = arith.constant 0 : i32
    %c0_i32_1 = arith.constant 0 : i32
    return %2, %c0_i32_0 : i32, i32
  }
  func.func @transform_1(%arg0: i32, %arg1: i32) -> (i32, i32) {
    %c1_i32 = arith.constant 1 : i32
    %0 = arith.muli %arg0, %c1_i32 : i32
    %1 = arith.addi %0, %arg1 : i32
    %c0_i32 = arith.constant 0 : i32
    %2 = arith.minsi %1, %c0_i32 : i32
    %c0_i32_0 = arith.constant 0 : i32
    %c0_i32_1 = arith.constant 0 : i32
    return %2, %c0_i32_0 : i32, i32
  }
  func.func @transform_2(%arg0: i32, %arg1: i32) -> (i32, i32, i32) {
    %c1_i32 = arith.constant 1 : i32
    %0 = arith.muli %arg0, %c1_i32 : i32
    %1 = arith.addi %0, %arg1 : i32
    %c0_i32 = arith.constant 0 : i32
    %c0_i32_0 = arith.constant 0 : i32
    %c0_i32_1 = arith.constant 0 : i32
    return %1, %c0_i32, %c0_i32_0 : i32, i32, i32
  }
  func.func @transform_3(%arg0: i32, %arg1: i32) -> (i32, i32) {
    %c0_i32 = arith.constant 0 : i32
    %c0_i32_0 = arith.constant 0 : i32
    return %arg0, %c0_i32 : i32, i32
  }
  func.func @transform_4(%arg0: i32, %arg1: i32) -> (i32, i32) {
    %c0_i32 = arith.constant 0 : i32
    %c0_i32_0 = arith.constant 0 : i32
    return %arg0, %c0_i32 : i32, i32
  }
}

</mosaic_0001>

<llo_original>
// kernel: tpu_custom_call.1
$region0: #{tpu_custom_call.1}
  #allocation0 [shape = 'u32[]', space=smem, size = 0x4, offset = 0x4, fixed_abs, tag = 'smem constant byte address 0x4 - core index']
  #allocation1 [shape = 'u32[72,128]{1,0:T(1,128)}', space=vmem, size = 0x9000, scoped, tag = 'internal scratch']
  #allocation2 [shape = 'f32[16,1]{1,0:T(8,128)}', space=vmem, size = 0x2000, scoped, tag = 'scratch operand']
  #allocation3 [shape = 'f32[1,128]{1,0:T(1,128)}', space=vmem, size = 0x200, scoped, tag = 'scratch operand']
  %s0 = inlined_call_operand.vmem [shape: f32[16,10], index: 0, kind: input, shape index: {}]
  %s1 = inlined_call_operand.vmem [shape: s32[16,1], index: 1, kind: input, shape index: {}]
  %s2 = inlined_call_operand.vmem [shape: f32[1,1,128], index: 2, kind: input, shape index: {}]
  %s3 = inlined_call_operand.hbm [shape: f32[8,128], index: 3, kind: output, shape index: {0}]
  %s4 = inlined_call_operand.hbm [shape: f32[8,128], index: 4, kind: output, shape index: {1}]
  %5 = xla_tuple %s3, %s4
  %s6 = sld [smem:[#allocation0]]
  $region38: #{tpu_custom_call.1} parent=0
    _
  %s8 = ssub.s32 1, %s6
  %s9 = scalar_select 0, %s8, %s6
  $region1: #{tpu_custom_call.1} parent=0
    #allocation4 [shape = 'u8[4096]{0}', space=vmem, size = 0x1000, scoped, tag = 'output window, operand 0, single buffered']
    #allocation5 [shape = 's32[1]{0}', space=sflag, size = 0x4, scoped, tag = 'scoped memory for tpu_custom_call.1']
    #allocation6 [shape = 'u8[4096]{0}', space=vmem, size = 0x1000, scoped, tag = 'output window, operand 1, single buffered']
    #allocation7 [shape = 's32[1]{0}', space=sflag, size = 0x4, scoped, tag = 'scoped memory for tpu_custom_call.1']
    %10 = vsyncpa [#allocation5], 0
    %11 = vsyncpa [#allocation7], 0
    // Predicated region
    $region2: #{tpu_custom_call.1} parent=1 // pred_check
      _
    $region3: #{tpu_custom_call.1} parent=1 // pred_check_branch
      %13 = sbr.rel (0) target = $region5
    $region4: #{tpu_custom_call.1} parent=1 // pred_region
      %s14 = sadd.s32 0, 0
      %p15 = scmp.lt.s32.totalorder %s14, 0
      %s16 = scalar_select %p15, %s14, 0
      %s17 = smul.u32 2, %s16
      %p18 = scmp.lt.s32.totalorder %s17, 1
      %s19 = scalar_select %p18, %s17, 1
      %s20 = smul.addr %s19, 8
      %s21 = scalar_lea.vmem %s0, %s20
      %s22 = sadd.s32 0, 0
      %p23 = scmp.lt.s32.totalorder %s22, 0
      %s24 = scalar_select %p23, %s22, 0
      %s25 = smul.u32 2, %s24
    $region5: #{tpu_custom_call.1} parent=1 // pred_fallthru
      _
    // Predicated region
    $region6: #{tpu_custom_call.1} parent=1 // pred_check
      _
    $region7: #{tpu_custom_call.1} parent=1 // pred_check_branch
      %27 = sbr.rel (0) target = $region9
    $region8: #{tpu_custom_call.1} parent=1 // pred_region
      %s28 = sadd.s32 0, 0
      %p29 = scmp.lt.s32.totalorder %s28, 0
      %s30 = scalar_select %p29, %s28, 0
      %s31 = smul.u32 2, %s30
      %p32 = scmp.lt.s32.totalorder %s31, 1
      %s33 = scalar_select %p32, %s31, 1
      %s34 = smul.addr %s33, 8
      %s35 = scalar_lea.vmem %s1, %s34
      %s36 = sadd.s32 0, 0
      %p37 = scmp.lt.s32.totalorder %s36, 0
      %s38 = scalar_select %p37, %s36, 0
      %s39 = smul.u32 2, %s38
    $region9: #{tpu_custom_call.1} parent=1 // pred_fallthru
      _
    // Predicated region
    $region10: #{tpu_custom_call.1} parent=1 // pred_check
      _
    $region11: #{tpu_custom_call.1} parent=1 // pred_check_branch
      %41 = sbr.rel (0) target = $region13
    $region12: #{tpu_custom_call.1} parent=1 // pred_region
      %s42 = sadd.s32 0, 0
      %p43 = scmp.lt.s32.totalorder %s42, 0
      %s44 = scalar_select %p43, %s42, 0
      %s45 = scalar_lea.vmem %s2, %s44
      %s46 = sadd.s32 0, 0
    $region13: #{tpu_custom_call.1} parent=1 // pred_fallthru
      _
    %s47 = sadd.s32 0, 0
    %p48 = scmp.lt.s32.totalorder %s47, 0
    %s49 = scalar_select %p48, %s47, 0
    %s50 = smul.u32 2, %s49
    %p51 = scmp.lt.s32.totalorder %s50, 1
    %s52 = scalar_select %p51, %s50, 1
    %s53 = smul.addr %s52, 8
    %s54 = scalar_lea.vmem %s0, %s53
    %s55 = sadd.s32 0, 0
    %p56 = scmp.lt.s32.totalorder %s55, 0
    %s57 = scalar_select %p56, %s55, 0
    %s58 = smul.u32 2, %s57
    %p59 = scmp.lt.s32.totalorder %s58, 1
    %s60 = scalar_select %p59, %s58, 1
    %s61 = smul.addr %s60, 8
    %s62 = scalar_lea.vmem %s1, %s61
    %s63 = sadd.s32 0, 0
    %p64 = scmp.lt.s32.totalorder %s63, 0
    %s65 = scalar_select %p64, %s63, 0
    %s66 = scalar_lea.vmem %s2, %s65
    %s67 = sadd.s32 0, 0
    %p68 = scmp.lt.s32.totalorder %s67, 0
    %s69 = scalar_select %p68, %s67, 0
    %s70 = smul.u32 2, %s69
    %p71 = scmp.lt.s32.totalorder %s70, 1
    %s72 = scalar_select %p71, %s70, 1
    %s73 = smul.addr %s72, 8
    %s74 = scalar_lea.vmem %s0, %s73
    %s75 = sadd.s32 0, 0
    %p76 = scmp.lt.s32.totalorder %s75, 0
    %s77 = scalar_select %p76, %s75, 0
    %s78 = smul.u32 2, %s77
    %s79 = sadd.s32 0, 0
    %p80 = scmp.lt.s32.totalorder %s79, 0
    %s81 = scalar_select %p80, %s79, 0
    %s82 = smul.u32 2, %s81
    %p83 = scmp.lt.s32.totalorder %s82, 1
    %s84 = scalar_select %p83, %s82, 1
    %s85 = smul.addr %s84, 8
    %s86 = scalar_lea.vmem %s1, %s85
    %s87 = sadd.s32 0, 0
    %p88 = scmp.lt.s32.totalorder %s87, 0
    %s89 = scalar_select %p88, %s87, 0
    %s90 = smul.u32 2, %s89
    %s91 = sadd.s32 0, 0
    %p92 = scmp.lt.s32.totalorder %s91, 0
    %s93 = scalar_select %p92, %s91, 0
    %s94 = scalar_lea.vmem %s2, %s93
    %s95 = sadd.s32 0, 0
    %p96 = scmp.eq.s32.totalorder 0, 0
    // Predicated region
    $region14: #{tpu_custom_call.1} parent=1 // pred_check
      %p97 = pneg %p96
    $region15: #{tpu_custom_call.1} parent=1 // pred_check_branch
      %99 = sbr.rel (%p97) target = $region17
    $region16: #{tpu_custom_call.1} parent=1 // pred_region
      %vm100 = vcmask 7168
      %101 = vst.msk [vmem:[#allocation2] sm:$0xff] %vm100, 0.0
      %102 = vst.msk [vmem:[#allocation2 + $0x8] sm:$0xff] %vm100, 0.0
      %103 = vst [vmem:[#allocation3] sm:$0x1] 0.0
    $region17: #{tpu_custom_call.1} parent=1 // pred_fallthru
      _
    %v104 = vld [vmem:[%s74] sm:$0xff]
    %v105 = vld [vmem:[%s74 + $0x8] sm:$0xff]
    %v106 = vld [vmem:[%s86] sm:$0xff]
    %v107 = vld [vmem:[%s86 + $0x8] sm:$0xff]
    %vm108 = vcmask 80896
    %v109 = vsel %vm108, %v104, -inf
    %110 = vmax.xlane.f32.xlu0 %v109
    %v111 = vpop.xlane.xlu0 %110
    %v112 = vsel %vm108, %v105, -inf
    %113 = vmax.xlane.f32.xlu0 %v112
    %v114 = vpop.xlane.xlu0 %113
    %v115 = vsub.f32 %v104, %v111
    %v116 = vsub.f32 %v105, %v114
    %v117 = vmul.f32 %v115, 1.442695
    %v118 = vpow.pop %v117
    %v119 = vmul.f32 %v116, 1.442695
    %v120 = vpow.pop %v119
    %v121 = vsel %vm108, %v118, 0.0
    %122 = vadd.xlane.f32.xlu0 %v121
    %v123 = vpop.xlane.xlu0 %122
    %v124 = vsel %vm108, %v120, 0.0
    %125 = vadd.xlane.f32.xlu0 %v124
    %v126 = vpop.xlane.xlu0 %125
    %v127 = vlog2.pop %v123
    %v128 = vmul.f32 %v127, 0.6931472
    %v129 = vlog2.pop %v126
    %v130 = vmul.f32 %v129, 0.6931472
    %v131 = vadd.f32 %v128, %v111
    %v132 = vadd.f32 %v130, %v114
    %v133 = vlaneseq
    %v134 = vand.u32 %v133, 127
    %135 = vset.pattern.permute.xlu0 0
    %136 = vperm.xlu0 %135, %v106
    %v137 = vpop.permute.xlu0 %136
    %138 = vset.pattern.permute.xlu0 0
    %139 = vperm.xlu0 %138, %v107
    %v140 = vpop.permute.xlu0 %139
    %vm141 = vcmp.eq.s32.totalorder %v134, %v137
    %vm142 = vcmp.eq.s32.totalorder %v134, %v140
    %v143 = vsel %vm141, %v104, 0.0
    %v144 = vsel %vm142, %v105, 0.0
    %v145 = vsel %vm108, %v143, 0.0
    %146 = vadd.xlane.f32.xlu0 %v145
    %v147 = vpop.xlane.xlu0 %146
    %v148 = vsel %vm108, %v144, 0.0
    %149 = vadd.xlane.f32.xlu0 %v148
    %v150 = vpop.xlane.xlu0 %149
    %v151 = vsub.f32 %v131, %v147
    %v152 = vsub.f32 %v132, %v150
    %v153 = vld [vmem:[#allocation2] sm:$0xff]
    %v154 = vld [vmem:[#allocation2 + $0x8] sm:$0xff]
    %v155 = vadd.f32 %v153, %v151
    %v156 = vadd.f32 %v154, %v152
    %vm157 = vcmask 7168
    %158 = vst.msk [vmem:[#allocation2] sm:$0xff] %vm157, %v155
    %159 = vst.msk [vmem:[#allocation2 + $0x8] sm:$0xff] %vm157, %v156
    %v160 = vld [vmem:[#allocation3] sm:$0x1]
    %v161 = vld [vmem:[%s94] sm:$0x1]
    %v162 = vadd.f32 %v160, %v161
    %163 = vst [vmem:[#allocation3] sm:$0x1] %v162
    // Predicated region
    $region18: #{tpu_custom_call.1} parent=1 // pred_check
      %p164 = pneg %p96
    $region19: #{tpu_custom_call.1} parent=1 // pred_check_branch
      %166 = sbr.rel (%p164) target = $region21
    $region20: #{tpu_custom_call.1} parent=1 // pred_region
      %v167 = vld [vmem:[#allocation2] sm:$0xff]
      %v168 = vld [vmem:[#allocation2 + $0x8] sm:$0xff]
      %v169 = vsel %vm157, %v167, 0.0
      %v170 = vsel %vm157, %v168, 0.0
      %v171 = vadd.f32 %v169, %v170
      %172 = vadd.xlane.f32.xlu0 %v171
      %v173 = vpop.xlane.xlu0 %172
      %v174 = vrot.slane %v173, 4
      %v175 = vadd.f32 %v173, %v174
      %v176 = vrot.slane %v175, 2
      %v177 = vadd.f32 %v175, %v176
      %v178 = vrot.slane %v177, 1
      %v179 = vadd.f32 %v177, %v178
      %s180 = vtos %v179
      %v181 = vstv %s180
      %v182 = vadd.f32 %v181, 0.0
      %183 = vst [vmem:[#allocation4] sm:$0xff] %v182
      %v184 = vld [vmem:[#allocation3] sm:$0x1]
      %vm185 = vcmask 1040384
      %v186 = vsel %vm185, %v184, 0.0
      %187 = vadd.xlane.f32.xlu0 %v186
      %v188 = vpop.xlane.xlu0 %187
      %v189 = vrot.slane %v188, 4
      %v190 = vadd.f32 %v188, %v189
      %v191 = vrot.slane %v190, 2
      %v192 = vadd.f32 %v190, %v191
      %v193 = vrot.slane %v192, 1
      %v194 = vadd.f32 %v192, %v193
      %s195 = vtos %v194
      %v196 = vstv %s195
      %v197 = vadd.f32 %v196, 0.0
      %198 = vst [vmem:[#allocation6] sm:$0xff] %v197
    $region21: #{tpu_custom_call.1} parent=1 // pred_fallthru
      _
    // Predicated region
    $region22: #{tpu_custom_call.1} parent=1 // pred_check
      _
    $region23: #{tpu_custom_call.1} parent=1 // pred_check_branch
      %200 = sbr.rel (0) target = $region25
    $region24: #{tpu_custom_call.1} parent=1 // pred_region
      %202 = vsyncadd [#allocation5], 0
      %s204 = sshll.u32 [#allocation4], 4
      %s205 = int_to_ptr.vmem [resolvable:$true] %s204
      %s206 = sshll.u32 %s3, 4
      %s207 = int_to_ptr.hbm [resolvable:$true] %s206
      %209 = dma.vmem_to_hbm [thread:$0]  %s205, 128, %s207, [#allocation5]
    $region25: #{tpu_custom_call.1} parent=1 // pred_fallthru
      _
    // Predicated region
    $region26: #{tpu_custom_call.1} parent=1 // pred_check
      _
    $region27: #{tpu_custom_call.1} parent=1 // pred_check_branch
      %211 = sbr.rel (0) target = $region29
    $region28: #{tpu_custom_call.1} parent=1 // pred_region
      %213 = vsyncadd [#allocation7], 0
      %s215 = sshll.u32 [#allocation6], 4
      %s216 = int_to_ptr.vmem [resolvable:$true] %s215
      %s217 = sshll.u32 %s4, 4
      %s218 = int_to_ptr.hbm [resolvable:$true] %s217
      %220 = dma.vmem_to_hbm [thread:$0]  %s216, 128, %s218, [#allocation7]
    $region29: #{tpu_custom_call.1} parent=1 // pred_fallthru
      _
    // Predicated region
    $region30: #{tpu_custom_call.1} parent=1 // pred_check
      _
    $region31: #{tpu_custom_call.1} parent=1 // pred_check_branch
      %222 = sbr.rel (0) target = $region33
    $region32: #{tpu_custom_call.1} parent=1 // pred_region
      %224 = dma.done [#allocation5], 128
    $region33: #{tpu_custom_call.1} parent=1 // pred_fallthru
      _
    // Predicated region
    $region34: #{tpu_custom_call.1} parent=1 // pred_check
      _
    $region35: #{tpu_custom_call.1} parent=1 // pred_check_branch
      %226 = sbr.rel (0) target = $region37
    $region36: #{tpu_custom_call.1} parent=1 // pred_region
      %228 = dma.done [#allocation7], 128
    $region37: #{tpu_custom_call.1} parent=1 // pred_fallthru
      _
    %229 = vsyncpa [#allocation5], 1
    %230 = vsyncpa [#allocation7], 1

</llo_original>
